<compile_context>
chip_gen: v6e
topology: v6e:2x2x1
jax: 0.10.0
libtpu: 0.0.40
codegen_flags: <defaults>
</compile_context>

<pallas_src>
import jax
import jax.numpy as jnp
from jax.experimental import pallas as pl
from jax.experimental.pallas import tpu as pltpu

_LANES = 128


def _round_up(a, b):
    return ((a + b - 1) // b) * b


def _sublane(itemsize):
    # Sublane granularity by dtype width (f32:8, bf16:16, int8/fp8:32).
    return {4: 8, 2: 16, 1: 32}.get(itemsize, 8)


def _padded_tile_bytes(rows, cols, itemsize):
    """VMEM footprint of a (rows, cols) tile with (sublane, 128) padding."""
    return (_round_up(max(rows, 1), _sublane(itemsize))
            * _round_up(max(cols, 1), _LANES) * itemsize)


def _matmul_bias_kernel(x_ref, w_ref, b_ref, o_ref):
    # x_ref: (tm, K); w_ref: (K, N); b_ref: (1, N); o_ref: (tm, N).
    acc = jnp.dot(x_ref[...], w_ref[...], preferred_element_type=jnp.float32)
    acc = acc + b_ref[...].astype(jnp.float32)
    o_ref[...] = acc.astype(o_ref.dtype)


def _matmul_kernel(x_ref, w_ref, o_ref):
    acc = jnp.dot(x_ref[...], w_ref[...], preferred_element_type=jnp.float32)
    o_ref[...] = acc.astype(o_ref.dtype)


def prepare_for_self_attention(x, weight, bias=None, *, max_tm=8192):
    """Equivalent of PrepareForSelfAttention.forward.

    x:      (..., o11y_length)
    weight: (d_k, o11y_length)   -- PyTorch nn.Linear weight layout
    bias:   (d_k,) or None
    returns (..., d_k)
    """
    *lead, K = x.shape
    d_k, K_w = weight.shape
    assert K_w == K

    M = 1
    for d in lead:
        M *= d
    x2 = x.reshape(M, K)

    itemsize = jnp.dtype(x.dtype).itemsize
    w_itemsize = jnp.dtype(weight.dtype).itemsize
    sub = _sublane(itemsize)

    # ---- Lane-dense packing --------------------------------------------------
    # (M, K) row-major is bit-identical to (M // P, P*K); when P*K == 128 the x
    # loads are full 128-lane vectors.  A block-diagonal weight
    # block_diag(W^T,...,W^T) (P copies, built once) makes the output
    # (M // P, P*d_k) the bit-identical packed form of (M, d_k), so stores are
    # unmasked full-lane vst as well -- no in-kernel repack needed.
    pack = 1
    if K < _LANES and _LANES % K == 0:
        p = _LANES // K
        if p > 1 and M % p == 0 and (p * d_k) % _LANES == 0:
            pack = p

    if pack > 1:
        M_eff, K_eff, N_eff = M // pack, pack * K, pack * d_k
        x_in = x2.reshape(M_eff, K_eff)
        # One-time, tiny: kron(I_P, W^T) == block_diag of P copies of W^T,
        # already in (K, N) layout -> plain contraction, no in-kernel transpose.
        w_mat = jnp.kron(jnp.eye(pack, dtype=weight.dtype), weight.T)
        b_mat = jnp.tile(bias, pack).reshape(1, N_eff) if bias is not None else None
    else:
        M_eff, K_eff, N_eff = M, K, d_k
        x_in = x2
        # Transpose the (small, constant) weight once wrapper-side.
        w_mat = weight.T
        b_mat = bias.reshape(1, N_eff) if bias is not None else None
        # TODO(synk): when d_k is not lane-dense (128 % d_k != 0) output stores
        # stay masked; a repack would cost an extra HBM pass for this projection.

    # ---- Row-tile selection (padded-aware VMEM accounting) -------------------
    def footprint(t):
        f = 2 * _padded_tile_bytes(t, K_eff, itemsize)        # x tile, dbl-buf
        f += 2 * _padded_tile_bytes(t, N_eff, itemsize)        # out tile, dbl-buf
        f += 2 * _padded_tile_bytes(K_eff, N_eff, w_itemsize)  # resident weight
        if b_mat is not None:
            f += 2 * _padded_tile_bytes(1, N_eff, w_itemsize)  # resident bias
        return f

    vmem_budget = 24 * 1024 * 1024  # conservative working set (safe on v7x 64 MiB)

    bytes_per_row = (_round_up(K_eff, _LANES) + _round_up(N_eff, _LANES)) * itemsize
    # Rows needed for >= ~1 MiB of HBM traffic per grid step (amortize ~0.35 us
    # fixed per-step overhead in this HBM-bound kernel).
    min_rows = max(sub, _round_up(-(-(1 << 20) // bytes_per_row), sub))

    tm = min(_round_up(max_tm, sub), _round_up(M_eff, sub))
    # Give the "parallel" row axis several blocks so v7x's two TensorCores both
    # get work (no effect on single-TC v5e/v6e), without dropping below ~1 MiB
    # of traffic per step.
    target_blocks = 8
    if M_eff >= target_blocks * min_rows:
        tm = min(tm, _round_up(-(-M_eff // target_blocks), sub))
    while tm > sub and footprint(tm) > vmem_budget:
        tm = _round_up(tm // 2, sub)
    tm = max(tm, sub)
    if tm >= M_eff:
        tm = M_eff  # single whole-M block: block dim == full array dim (legal)

    grid = (pl.cdiv(M_eff, tm),)

    x_spec = pl.BlockSpec((tm, K_eff), lambda i: (i, 0))
    w_spec = pl.BlockSpec((K_eff, N_eff), lambda i: (0, 0))   # constant block
    o_spec = pl.BlockSpec((tm, N_eff), lambda i: (i, 0))
    out_shape = jax.ShapeDtypeStruct((M_eff, N_eff), x.dtype)

    vmem_limit = int(min(max(2 * footprint(tm), 16 * 1024 * 1024),
                         48 * 1024 * 1024))
    cparams = pltpu.CompilerParams(
        dimension_semantics=("parallel",),
        vmem_limit_bytes=vmem_limit,
    )
    cost = pl.CostEstimate(
        flops=2 * M * K * d_k,
        transcendentals=0,
        bytes_accessed=(itemsize * (M * K + M * d_k)
                        + w_itemsize * (K_eff * N_eff
                                        + (N_eff if b_mat is not None else 0))),
    )

    if b_mat is not None:
        b_spec = pl.BlockSpec((1, N_eff), lambda i: (0, 0))   # constant block
        out = pl.pallas_call(
            _matmul_bias_kernel,
            out_shape=out_shape,
            grid_spec=pltpu.PrefetchScalarGridSpec(
                num_scalar_prefetch=0,
                grid=grid,
                in_specs=[x_spec, w_spec, b_spec],
                out_specs=o_spec,
            ),
            compiler_params=cparams,
            cost_estimate=cost,
        )(x_in, w_mat, b_mat)
    else:
        out = pl.pallas_call(
            _matmul_kernel,
            out_shape=out_shape,
            grid_spec=pltpu.PrefetchScalarGridSpec(
                num_scalar_prefetch=0,
                grid=grid,
                in_specs=[x_spec, w_spec],
                out_specs=o_spec,
            ),
            compiler_params=cparams,
            cost_estimate=cost,
        )(x_in, w_mat)

    if pack > 1:
        out = out.reshape(M, d_k)   # free metadata reshape back to logical layout
    return out.reshape(*lead, d_k)


if __name__ == "__main__":
    # Small, module-consistent shapes: batch=2, seq=8, o11y_length=32, d_k=32.
    batch, seq = 2, 8
    o11y_length, d_k = 32, 32
    use_bias = True

    key = jax.random.PRNGKey(0)
    kx, kw, kb = jax.random.split(key, 3)

    x = jax.random.normal(kx, (batch, seq, o11y_length), dtype=jnp.float32)

    # Deterministic parameter init mimicking nn.Linear's uniform(-1/sqrt(fan_in), +).
    bound = 1.0 / (o11y_length ** 0.5)
    weight = jax.random.uniform(kw, (d_k, o11y_length), jnp.float32, -bound, bound)
    bias = jax.random.uniform(kb, (d_k,), jnp.float32, -bound, bound) if use_bias else None

    fn = jax.jit(prepare_for_self_attention)
    out = fn(x, weight, bias)
    jax.block_until_ready(out)

    # Reference check in plain JAX.
    ref = x @ weight.T + (bias if bias is not None else 0.0)
    assert out.shape == (batch, seq, d_k)
    assert jnp.allclose(out, ref, atol=1e-5, rtol=1e-5)

    print("KERNEL_OK")
</pallas_src>

<mosaic_0001>
module attributes {stable_mosaic.version = 11 : i64} {
  func.func @_matmul_bias_kernel(%arg0: i32, %arg1: memref<4x128xf32, #tpu.memory_space<vmem>>, %arg2: memref<128x128xf32, #tpu.memory_space<vmem>>, %arg3: memref<1x128xf32, #tpu.memory_space<vmem>>, %arg4: memref<4x128xf32, #tpu.memory_space<vmem>>) attributes {dimension_semantics = [#tpu.dimension_semantics<parallel>], iteration_bounds = array<i64: 1>, scalar_prefetch = 0 : i64, scratch_operands = 0 : i64, tpu.core_type = #tpu.core_type<tc>, window_params = [{transform_indices = @transform_0, window_bounds = array<i64: 4, 128>}, {pipeline_mode = #tpu.pipeline_mode<synchronous>, transform_indices = @transform_1, window_bounds = array<i64: 128, 128>}, {pipeline_mode = #tpu.pipeline_mode<synchronous>, transform_indices = @transform_2, window_bounds = array<i64: 1, 128>}, {transform_indices = @transform_3, window_bounds = array<i64: 4, 128>}]} {
    %c0 = arith.constant 0 : index
    %c0_0 = arith.constant 0 : index
    %0 = vector.load %arg1[%c0, %c0_0] : memref<4x128xf32, #tpu.memory_space<vmem>>, vector<4x128xf32>
    %c0_1 = arith.constant 0 : index
    %c0_2 = arith.constant 0 : index
    %1 = vector.load %arg2[%c0_1, %c0_2] : memref<128x128xf32, #tpu.memory_space<vmem>>, vector<128x128xf32>
    %cst = arith.constant dense<0.000000e+00> : vector<4x128xf32>
    %2 = tpu.matmul %0, %1, %cst {dimension_numbers = #tpu.dot_dimension_numbers<[1], [0], [0], [1], [0, 0, 1, 1], [], []>} : vector<4x128xf32>, vector<128x128xf32>, vector<4x128xf32> -> vector<4x128xf32>
    %c0_3 = arith.constant 0 : index
    %c0_4 = arith.constant 0 : index
    %3 = vector.load %arg3[%c0_3, %c0_4] : memref<1x128xf32, #tpu.memory_space<vmem>>, vector<1x128xf32>
    %4 = vector.broadcast %3 : vector<1x128xf32> to vector<4x128xf32>
    %5 = arith.addf %2, %4 : vector<4x128xf32>
    %c0_5 = arith.constant 0 : index
    %c0_6 = arith.constant 0 : index
    %6 = vector.load %arg4[%c0_5, %c0_6] : memref<4x128xf32, #tpu.memory_space<vmem>>, vector<4x128xf32>
    tpu.vector_store %arg4[%c0_5, %c0_6], %5 {strides = array<i32>} : memref<4x128xf32, #tpu.memory_space<vmem>>, vector<4x128xf32>,
    return
  }
  func.func @transform_0(%arg0: i32) -> (i32, i32) {
    %c0_i32 = arith.constant 0 : i32
    %c0_i32_0 = arith.constant 0 : i32
    return %arg0, %c0_i32 : i32, i32
  }
  func.func @transform_1(%arg0: i32) -> (i32, i32) {
    %c0_i32 = arith.constant 0 : i32
    %c0_i32_0 = arith.constant 0 : i32
    %c0_i32_1 = arith.constant 0 : i32
    return %c0_i32, %c0_i32_0 : i32, i32
  }
  func.func @transform_2(%arg0: i32) -> (i32, i32) {
    %c0_i32 = arith.constant 0 : i32
    %c0_i32_0 = arith.constant 0 : i32
    %c0_i32_1 = arith.constant 0 : i32
    return %c0_i32, %c0_i32_0 : i32, i32
  }
  func.func @transform_3(%arg0: i32) -> (i32, i32) {
    %c0_i32 = arith.constant 0 : i32
    %c0_i32_0 = arith.constant 0 : i32
    return %arg0, %c0_i32 : i32, i32
  }
}

</mosaic_0001>

<llo_original>
// kernel: tile.8
$region0: #{tile.8}
  #allocation0 [shape = 's32[1]{0}', space=sflag, size = 0x4, scoped, tag = 'scoped memory for tile.8']
  %s0 = inlined_call_operand.vmem [shape: f32[32], index: 0, kind: input, shape index: {}]
  %s1 = inlined_call_operand.vmem [shape: f32[4,32], index: 1, kind: output, shape index: {}]
  // Predicated region
  $region2: #{tile.8} parent=0 // pred_check
    _
  $region3: #{tile.8} parent=0 // pred_check_branch
    %3 = sbr.rel (0) target = $region5
  $region4: #{tile.8} parent=0 // pred_region
    _
  $region5: #{tile.8} parent=0 // pred_fallthru
    _
  %v4 = vld [vmem:[%s0] ss:$0 sm:$0xff]
  %5 = vst [vmem:[%s1] sm:$0xf] %v4

// kernel: tile.9
$region0: #{tile.9}
  %s0 = inlined_call_operand.vmem [shape: f32[4,32], index: 0, kind: input, shape index: {}]
  %s1 = inlined_call_operand.vmem [shape: f32[1,128], index: 1, kind: output, shape index: {}]
  $region1: #{tile.9} parent=0
    #allocation0 [shape = 'u8[4096]{0}', space=vmem, size = 0x1000, scoped, tag = 'scoped mem for output reshape']
    #allocation1 [shape = 'u8[4096]{0}', space=vmem, size = 0x1000, scoped, tag = 'scoped mem for input reshape']
    %s3 = sshll.u32 1, 4
    %s4 = ssub.s32 %s3, 1
    %v5 = vld [vmem:[%s0] sm:%s4]
    %6 = vst [vmem:[#allocation1] sm:%s4] %v5
    %v7 = vld [vmem:[#allocation1] sm:$0x1]
    %vm8 = vcmask 261120
    %9 = vst.msk [vmem:[#allocation0] sm:$0x1] %vm8, %v7
    %s10 = scalar_lea.vmem [#allocation1], 3
    %v11 = vld [vmem:[%s10] sm:$0x1]
    %12 = vrot.lane.b32.xlu0 %v11, 96
    %v13 = vpop.permute.xlu0 %12
    %vm14 = vcmask 1048320
    %15 = vst.msk [vmem:[#allocation0] sm:$0x1] %vm14, %v13
    %s16 = scalar_lea.vmem [#allocation1], 2
    %v17 = vld [vmem:[%s16] sm:$0x1]
    %18 = vrot.lane.b32.xlu0 %v17, 64
    %v19 = vpop.permute.xlu0 %18
    %vm20 = vcmask 785920
    %21 = vst.msk [vmem:[#allocation0] sm:$0x1] %vm20, %v19
    %s22 = scalar_lea.vmem [#allocation1], 1
    %v23 = vld [vmem:[%s22] sm:$0x1]
    %24 = vrot.lane.b32.xlu0 %v23, 32
    %v25 = vpop.permute.xlu0 %24
    %vm26 = vcmask 523520
    %27 = vst.msk [vmem:[#allocation0] sm:$0x1] %vm26, %v25
    %s29 = sshll.u32 1, 1
    %s30 = ssub.s32 %s29, 1
    %v32 = vld [vmem:[#allocation0] sm:%s30]
    %s33 = sshll.u32 1, 1
    %s34 = ssub.s32 %s33, 1
    %35 = vst [vmem:[%s1] sm:%s34] %v32

// kernel: prepare_for_self_attention.1
$region0: #{prepare_for_self_attention.1}
  #allocation0 [shape = 'u32[]', space=smem, size = 0x4, offset = 0x4, fixed_abs, tag = 'smem constant byte address 0x4 - core index']
  #allocation1 [shape = 'u32[144,128]{1,0:T(1,128)}', space=vmem, size = 0x12000, scoped, tag = 'internal scratch']
  %s0 = inlined_call_operand.vmem [shape: f32[4,128], index: 0, kind: input, shape index: {}]
  %s1 = inlined_call_operand.vmem [shape: f32[128,128], index: 1, kind: input, shape index: {}]
  %s2 = inlined_call_operand.vmem [shape: f32[1,128], index: 2, kind: input, shape index: {}]
  %s3 = inlined_call_operand.vmem [shape: f32[4,128], index: 3, kind: output, shape index: {}]
  %s4 = sld [smem:[#allocation0]]
  $region22: #{prepare_for_self_attention.1} parent=0
    _
  %s6 = ssub.s32 1, %s4
  %s7 = scalar_select 0, %s6, %s4
  // Predicated region
  $region2: #{prepare_for_self_attention.1} parent=0 // pred_check
    _
  $region3: #{prepare_for_self_attention.1} parent=0 // pred_check_branch
    %9 = sbr.rel (0) target = $region5
  $region4: #{prepare_for_self_attention.1} parent=0 // pred_region
    _
  $region5: #{prepare_for_self_attention.1} parent=0 // pred_fallthru
    _
  // Predicated region
  $region6: #{prepare_for_self_attention.1} parent=0 // pred_check
    _
  $region7: #{prepare_for_self_attention.1} parent=0 // pred_check_branch
    %11 = sbr.rel (0) target = $region9
  $region8: #{prepare_for_self_attention.1} parent=0 // pred_region
    _
  $region9: #{prepare_for_self_attention.1} parent=0 // pred_fallthru
    _
  // Predicated region
  $region10: #{prepare_for_self_attention.1} parent=0 // pred_check
    _
  $region11: #{prepare_for_self_attention.1} parent=0 // pred_check_branch
    %13 = sbr.rel (0) target = $region13
  $region12: #{prepare_for_self_attention.1} parent=0 // pred_region
    _
  $region13: #{prepare_for_self_attention.1} parent=0 // pred_fallthru
    _
  %v14 = vld [vmem:[%s0] sm:$0xf]
  %v15 = vld [vmem:[%s1] sm:$0xff]
  %v16 = vld [vmem:[%s1 + $0x8] sm:$0xff]
  %v17 = vld [vmem:[%s1 + $0x10] sm:$0xff]
  %v18 = vld [vmem:[%s1 + $0x18] sm:$0xff]
  %v19 = vld [vmem:[%s1 + $0x20] sm:$0xff]
  %v20 = vld [vmem:[%s1 + $0x28] sm:$0xff]
  %v21 = vld [vmem:[%s1 + $0x30] sm:$0xff]
  %v22 = vld [vmem:[%s1 + $0x38] sm:$0xff]
  %v23 = vld [vmem:[%s1 + $0x40] sm:$0xff]
  %v24 = vld [vmem:[%s1 + $0x48] sm:$0xff]
  %v25 = vld [vmem:[%s1 + $0x50] sm:$0xff]
  %v26 = vld [vmem:[%s1 + $0x58] sm:$0xff]
  %v27 = vld [vmem:[%s1 + $0x60] sm:$0xff]
  %v28 = vld [vmem:[%s1 + $0x68] sm:$0xff]
  %v29 = vld [vmem:[%s1 + $0x70] sm:$0xff]
  %v30 = vld [vmem:[%s1 + $0x78] sm:$0xff]
  %v31 = vld [vmem:[%s2] sm:$0x1]
  %v33 = vlaneseq
  %v34 = vshrl.u32 %v33, 7
  %v35 = vsub.s32 0, %v34
  %v36 = vrot.slane %v31, %v35
  %38 = vmatprep.subr.mxu0 0.0
  %39 = vmatpush1.msra.mxu0 %v30
  %40 = vmatprep.subr.mxu0 0.0
  %41 = vmatpush1.msra.mxu0 %v29
  %42 = vmatprep.subr.mxu0 0.0
  %43 = vmatpush1.msra.mxu0 %v28
  %44 = vmatprep.subr.mxu0 0.0
  %45 = vmatpush1.msra.mxu0 %v27
  %46 = vmatprep.subr.mxu0 0.0
  %47 = vmatpush1.msra.mxu0 %v26
  %48 = vmatprep.subr.mxu0 0.0
  %49 = vmatpush1.msra.mxu0 %v25
  %50 = vmatprep.subr.mxu0 0.0
  %51 = vmatpush1.msra.mxu0 %v24
  %52 = vmatprep.subr.mxu0 0.0
  %53 = vmatpush1.msra.mxu0 %v23
  %54 = vmatprep.subr.mxu0 0.0
  %55 = vmatpush1.msra.mxu0 %v22
  %56 = vmatprep.subr.mxu0 0.0
  %57 = vmatpush1.msra.mxu0 %v21
  %58 = vmatprep.subr.mxu0 0.0
  %59 = vmatpush1.msra.mxu0 %v20
  %60 = vmatprep.subr.mxu0 0.0
  %61 = vmatpush1.msra.mxu0 %v19
  %62 = vmatprep.subr.mxu0 0.0
  %63 = vmatpush1.msra.mxu0 %v18
  %64 = vmatprep.subr.mxu0 0.0
  %65 = vmatpush1.msra.mxu0 %v17
  %66 = vmatprep.subr.mxu0 0.0
  %67 = vmatpush1.msra.mxu0 %v16
  %68 = vmatprep.subr.mxu0 0.0
  %69 = vmatpush1.msra.mxu0 %v15
  %70 = vmatprep.subr.mxu0 0.0
  %71 = vmatpush2.msra.mxu0 0.0
  %72 = vmatprep.subr.mxu0 0.0
  %73 = vmatpush2.msra.mxu0 0.0
  %74 = vmatprep.subr.mxu0 0.0
  %75 = vmatpush2.msra.mxu0 0.0
  %76 = vmatprep.subr.mxu0 0.0
  %77 = vmatpush2.msra.mxu0 0.0
  %78 = vmatprep.subr.mxu0 0.0
  %79 = vmatpush2.msra.mxu0 0.0
  %80 = vmatprep.subr.mxu0 0.0
  %81 = vmatpush2.msra.mxu0 0.0
  %82 = vmatprep.subr.mxu0 0.0
  %83 = vmatpush2.msra.mxu0 0.0
  %84 = vmatprep.subr.mxu0 0.0
  %85 = vmatpush2.msra.mxu0 0.0
  %86 = vmatprep.subr.mxu0 0.0
  %87 = vmatpush2.msra.mxu0 0.0
  %88 = vmatprep.subr.mxu0 0.0
  %89 = vmatpush2.msra.mxu0 0.0
  %90 = vmatprep.subr.mxu0 0.0
  %91 = vmatpush2.msra.mxu0 0.0
  %92 = vmatprep.subr.mxu0 0.0
  %93 = vmatpush2.msra.mxu0 0.0
  %94 = vmatprep.subr.mxu0 0.0
  %95 = vmatpush2.msra.mxu0 0.0
  %96 = vmatprep.subr.mxu0 0.0
  %97 = vmatpush2.msra.mxu0 0.0
  %98 = vmatprep.subr.mxu0 0.0
  %99 = vmatpush2.msra.mxu0 0.0
  %100 = vmatprep.subr.mxu0 0.0
  %101 = vmatpush2.msra.mxu0 0.0
  %102 = vmatprep.mubr.f32.mxu0 0.0
  %103 = vmatmul.mubr.f32.gmra.mxu0 %v14
  %v104 = vpop.f32.mrf.mxu0
  %v105 = vadd.f32 %v36, %v104
  %v106 = vpop.f32.mrf.mxu0
  %107 = vdwg.mxu0
  %108 = vst [vmem:[%s3] sm:$0xf] %v105
  // Predicated region
  $region14: #{prepare_for_self_attention.1} parent=0 // pred_check
    _
  $region15: #{prepare_for_self_attention.1} parent=0 // pred_check_branch
    %110 = sbr.rel (0) target = $region17
  $region16: #{prepare_for_self_attention.1} parent=0 // pred_region
    _
  $region17: #{prepare_for_self_attention.1} parent=0 // pred_fallthru
    _
  // Predicated region
  $region18: #{prepare_for_self_attention.1} parent=0 // pred_check
    _
  $region19: #{prepare_for_self_attention.1} parent=0 // pred_check_branch
    %112 = sbr.rel (0) target = $region21
  $region20: #{prepare_for_self_attention.1} parent=0 // pred_region
    _
  $region21: #{prepare_for_self_attention.1} parent=0 // pred_fallthru
    _

</llo_original>
